<compile_context>
chip_gen: v5e
topology: v5e:2x2
jax: 0.10.0
libtpu: 0.0.40
codegen_flags: <defaults>
</compile_context>

<pallas_src>
import functools

import numpy as np
import jax
import jax.numpy as jnp
from jax.experimental import pallas as pl
from jax.experimental.pallas import tpu as pltpu


# ~1 MiB per pipelined block: measured ~85% of HBM BW on v6e, within the v5e
# guidance (<= ~1 MiB/buffer) and far under v7x's 64 MiB physical VMEM.
_TARGET_BLOCK_BYTES = 1 << 20


def _pick_tile_rows(r_copy, n_batch, itemsize, sublane):
    """Largest divisor of r_copy whose (N, tm, 128) block is ~_TARGET_BLOCK_BYTES,
    preferring sublane-aligned tile heights."""
    target = max(sublane, _TARGET_BLOCK_BYTES // (n_batch * 128 * itemsize))
    target = min(target, r_copy)
    best_any, best_aligned = 1, 0
    d = 1
    while d * d <= r_copy:
        if r_copy % d == 0:
            for v in (d, r_copy // d):
                if v <= target:
                    best_any = max(best_any, v)
                    if v % sublane == 0:
                        best_aligned = max(best_aligned, v)
        d += 1
    return best_aligned if best_aligned else best_any


def _mbstd_kernel(x_ref, out_ref, acc_ref, *, n_copy, inv_nm1, inv_chw):
    """Grid steps [0, n_copy): copy x tile through and accumulate per-(row, lane)
    std (over batch) into acc.  Steps >= n_copy: broadcast the finished scalar
    std = sum(acc)/CHW into the appended channel."""
    i = pl.program_id(0)

    @pl.when(i == 0)
    def _init():
        acc_ref[...] = jnp.zeros_like(acc_ref)

    @pl.when(i < n_copy)
    def _copy_and_reduce():
        xb = x_ref[...]                                   # (N, tm, 128)
        out_ref[...] = xb                                 # pass-through copy of x
        xf = xb.astype(jnp.float32)
        mean = jnp.mean(xf, axis=0)                       # (tm, 128): VPU adds over batch
        d = xf - mean
        var = jnp.sum(d * d, axis=0) * inv_nm1            # unbiased (torch correction=1)
        acc_ref[...] += jnp.sqrt(var)                     # per-(row, lane) std, VPU accumulate

    @pl.when(i >= n_copy)
    def _fill_std_channel():
        std_val = jnp.sum(acc_ref[...]) * inv_chw         # scalar: mean of per-column stds
        out_ref[...] = jnp.broadcast_to(std_val, out_ref.shape).astype(out_ref.dtype)


def minibatch_stddev(x_nchw):
    """Forward of MiniBatchStdDev for NCHW input: returns (N, C+1, H, W)."""
    N, C, H, W = x_nchw.shape
    HW = H * W
    CHW = C * HW
    # TODO(synk): H*W not a multiple of 128 (StyleGAN 4x4 / 8x8 heads) needs lane
    # padding + masked stores; all larger resolutions satisfy this.
    assert HW % 128 == 0, "H*W must be a multiple of 128 for lane-dense tiles"
    assert N >= 2, "unbiased std over batch needs N >= 2 (matches torch semantics)"

    itemsize = jnp.dtype(x_nchw.dtype).itemsize
    sublane = max(8, 32 // max(itemsize, 1))   # 8 for f32, 16 for bf16, 32 for 8-bit

    r_copy = CHW // 128                        # input rows of 128 lanes per sample
    r_fill = HW // 128                         # appended std-channel rows
    r_total = r_copy + r_fill

    tm = _pick_tile_rows(r_copy, N, itemsize, sublane)
    n_copy = r_copy // tm
    n_fill = -(-r_fill // tm)                  # last fill block may overhang; OOB rows are masked
    n_total = n_copy + n_fill

    x3d = x_nchw.reshape(N, r_copy, 128)       # free reshape (row-major trailing split)

    kernel = functools.partial(
        _mbstd_kernel, n_copy=n_copy, inv_nm1=1.0 / (N - 1), inv_chw=1.0 / CHW)

    block_bytes = N * tm * 128 * itemsize
    acc_bytes = tm * 128 * 4
    # 2x in + 2x out double-buffered blocks + accumulator + headroom.
    vmem_limit = int(min(96 << 20, max(16 << 20, 4 * block_bytes + acc_bytes + (4 << 20))))

    cost = pl.CostEstimate(
        flops=6 * N * CHW,                     # sub/square/sum/mean per column
        transcendentals=CHW,                   # one sqrt per (c, h, w) position
        bytes_accessed=itemsize * (N * CHW + N * (CHW + HW)),
    )

    out3d = pl.pallas_call(
        kernel,
        out_shape=jax.ShapeDtypeStruct((N, r_total, 128), x_nchw.dtype),
        grid_spec=pltpu.PrefetchScalarGridSpec(
            num_scalar_prefetch=0,
            grid=(n_total,),
            in_specs=[
                # Clamp during fill steps: same block index as the last copy step,
                # so Pallas skips the (unused) input re-fetch there.
                pl.BlockSpec((N, tm, 128),
                             lambda i: (0, jnp.minimum(i, n_copy - 1), 0)),
            ],
            out_specs=pl.BlockSpec((N, tm, 128), lambda i: (0, i, 0)),
            scratch_shapes=[pltpu.VMEM((tm, 128), jnp.float32)],
        ),
        compiler_params=pltpu.CompilerParams(
            dimension_semantics=("arbitrary",),   # sequential accumulator chain
            vmem_limit_bytes=vmem_limit,
        ),
        cost_estimate=cost,
    )(x3d)

    # Free reshape: rows [0, r_copy) -> channels 0..C-1, last r_fill rows -> std channel.
    return out3d.reshape(N, C + 1, H, W)


if __name__ == "__main__":
    key = jax.random.PRNGKey(0)
    N, C, H, W = 2, 4, 16, 16
    x = jax.random.normal(key, (N, C, H, W), dtype=jnp.float32)

    y = jax.block_until_ready(minibatch_stddev(x))
    assert y.shape == (N, C + 1, H, W)

    # Reference: exactly the PyTorch module's math in plain JAX.
    std_ref = jnp.mean(jnp.std(x, axis=0, ddof=1))               # unbiased, like torch.std
    y_ref = jnp.concatenate([x, jnp.ones_like(x[:, :1]) * std_ref], axis=1)
    np.testing.assert_allclose(np.asarray(y), np.asarray(y_ref), rtol=1e-5, atol=1e-5)

    print("KERNEL_OK")
</pallas_src>

<mosaic_0001>
module attributes {stable_mosaic.version = 11 : i64} {
  func.func @_mbstd_kernel(%arg0: i32, %arg1: memref<2x8x128xf32, #tpu.memory_space<vmem>>, %arg2: memref<2x8x128xf32, #tpu.memory_space<vmem>>, %arg3: memref<8x128xf32, #tpu.memory_space<vmem>>) attributes {dimension_semantics = [#tpu.dimension_semantics<arbitrary>], iteration_bounds = array<i64: 2>, scalar_prefetch = 0 : i64, scratch_operands = 1 : i64, tpu.core_type = #tpu.core_type<tc>, window_params = [{transform_indices = @transform_0, window_bounds = array<i64: 2, 8, 128>}, {transform_indices = @transform_1, window_bounds = array<i64: 2, 8, 128>}]} {
    %c0_i32 = arith.constant 0 : i32
    %0 = arith.cmpi eq, %arg0, %c0_i32 : i32
    %1 = arith.extui %0 : i1 to i32
    %c0_i32_0 = arith.constant 0 : i32
    %2 = arith.cmpi ne, %1, %c0_i32_0 : i32
    scf.if %2 {
      %cst = arith.constant 0.000000e+00 : f32
      %9 = vector.broadcast %cst : f32 to vector<8x128xf32>
      %c0 = arith.constant 0 : index
      %c0_4 = arith.constant 0 : index
      %10 = vector.load %arg3[%c0, %c0_4] : memref<8x128xf32, #tpu.memory_space<vmem>>, vector<8x128xf32>
      tpu.vector_store %arg3[%c0, %c0_4], %9 {strides = array<i32>} : memref<8x128xf32, #tpu.memory_space<vmem>>, vector<8x128xf32>,
    } else {
    }
    %c1_i32 = arith.constant 1 : i32
    %3 = arith.cmpi slt, %arg0, %c1_i32 : i32
    %4 = arith.extui %3 : i1 to i32
    %c0_i32_1 = arith.constant 0 : i32
    %5 = arith.cmpi ne, %4, %c0_i32_1 : i32
    scf.if %5 {
      %c0 = arith.constant 0 : index
      %c0_4 = arith.constant 0 : index
      %c0_5 = arith.constant 0 : index
      %9 = vector.load %arg1[%c0, %c0_4, %c0_5] : memref<2x8x128xf32, #tpu.memory_space<vmem>>, vector<2x8x128xf32>
      %c0_6 = arith.constant 0 : index
      %c0_7 = arith.constant 0 : index
      %c0_8 = arith.constant 0 : index
      %10 = vector.load %arg2[%c0_6, %c0_7, %c0_8] : memref<2x8x128xf32, #tpu.memory_space<vmem>>, vector<2x8x128xf32>
      tpu.vector_store %arg2[%c0_6, %c0_7, %c0_8], %9 {strides = array<i32>} : memref<2x8x128xf32, #tpu.memory_space<vmem>>, vector<2x8x128xf32>,
      %cst = arith.constant dense<0.000000e+00> : vector<8x128xf32>
      %11 = vector.multi_reduction <add>, %9, %cst [0] : vector<2x8x128xf32> to vector<8x128xf32>
      %cst_9 = arith.constant 2.000000e+00 : f32
      %12 = vector.broadcast %cst_9 : f32 to vector<8x128xf32>
      %13 = arith.divf %11, %12 : vector<8x128xf32>
      %14 = vector.shape_cast %13 : vector<8x128xf32> to vector<1x8x128xf32>
      %15 = vector.broadcast %14 : vector<1x8x128xf32> to vector<2x8x128xf32>
      %16 = arith.subf %9, %15 : vector<2x8x128xf32>
      %17 = arith.mulf %16, %16 : vector<2x8x128xf32>
      %cst_10 = arith.constant dense<0.000000e+00> : vector<8x128xf32>
      %18 = vector.multi_reduction <add>, %17, %cst_10 [0] : vector<2x8x128xf32> to vector<8x128xf32>
      %cst_11 = arith.constant 1.000000e+00 : f32
      %19 = vector.broadcast %cst_11 : f32 to vector<8x128xf32>
      %20 = arith.mulf %18, %19 : vector<8x128xf32>
      %c0_12 = arith.constant 0 : index
      %c0_13 = arith.constant 0 : index
      %21 = vector.load %arg3[%c0_12, %c0_13] : memref<8x128xf32, #tpu.memory_space<vmem>>, vector<8x128xf32>
      %22 = math.sqrt %20 : vector<8x128xf32>
      %23 = arith.addf %21, %22 : vector<8x128xf32>
      %c0_14 = arith.constant 0 : index
      %c0_15 = arith.constant 0 : index
      %24 = vector.load %arg3[%c0_14, %c0_15] : memref<8x128xf32, #tpu.memory_space<vmem>>, vector<8x128xf32>
      tpu.vector_store %arg3[%c0_14, %c0_15], %23 {strides = array<i32>} : memref<8x128xf32, #tpu.memory_space<vmem>>, vector<8x128xf32>,
    } else {
    }
    %c1_i32_2 = arith.constant 1 : i32
    %6 = arith.cmpi sge, %arg0, %c1_i32_2 : i32
    %7 = arith.extui %6 : i1 to i32
    %c0_i32_3 = arith.constant 0 : i32
    %8 = arith.cmpi ne, %7, %c0_i32_3 : i32
    scf.if %8 {
      %c0 = arith.constant 0 : index
      %c0_4 = arith.constant 0 : index
      %9 = vector.load %arg3[%c0, %c0_4] : memref<8x128xf32, #tpu.memory_space<vmem>>, vector<8x128xf32>
      %10 = vector.shape_cast %9 : vector<8x128xf32> to vector<1x8x128xf32>
      %cst = arith.constant dense<0.000000e+00> : vector<1xf32>
      %11 = vector.multi_reduction <add>, %10, %cst [1, 2] : vector<1x8x128xf32> to vector<1xf32>
      %12 = vector.shape_cast %11 : vector<1xf32> to vector<1x1x1xf32>
      %13 = vector.extract %12[0, 0, 0] : f32 from vector<1x1x1xf32>
      %cst_5 = arith.constant 9.765625E-4 : f32
      %14 = arith.mulf %13, %cst_5 : f32
      %15 = vector.broadcast %14 : f32 to vector<2x8x128xf32>
      %c0_6 = arith.constant 0 : index
      %c0_7 = arith.constant 0 : index
      %c0_8 = arith.constant 0 : index
      %16 = vector.load %arg2[%c0_6, %c0_7, %c0_8] : memref<2x8x128xf32, #tpu.memory_space<vmem>>, vector<2x8x128xf32>
      tpu.vector_store %arg2[%c0_6, %c0_7, %c0_8], %15 {strides = array<i32>} : memref<2x8x128xf32, #tpu.memory_space<vmem>>, vector<2x8x128xf32>,
    } else {
    }
    return
  }
  func.func @transform_0(%arg0: i32) -> (i32, i32, i32) {
    %c0_i32 = arith.constant 0 : i32
    %0 = arith.minsi %arg0, %c0_i32 : i32
    %c0_i32_0 = arith.constant 0 : i32
    %c0_i32_1 = arith.constant 0 : i32
    %c0_i32_2 = arith.constant 0 : i32
    return %c0_i32_0, %0, %c0_i32_1 : i32, i32, i32
  }
  func.func @transform_1(%arg0: i32) -> (i32, i32, i32) {
    %c0_i32 = arith.constant 0 : i32
    %c0_i32_0 = arith.constant 0 : i32
    %c0_i32_1 = arith.constant 0 : i32
    return %c0_i32, %arg0, %c0_i32_0 : i32, i32, i32
  }
}

</mosaic_0001>

<llo_original>
// kernel: tpu_custom_call.1
$region0: #{tpu_custom_call.1}
  #allocation0 [shape = 'u32[]', space=smem, size = 0x4, offset = 0x4, fixed_abs, tag = 'smem constant byte address 0x4 - core index']
  #allocation1 [shape = 'u32[72,128]{1,0:T(1,128)}', space=vmem, size = 0x9000, scoped, tag = 'internal scratch']
  #allocation2 [shape = 'f32[8,128]{1,0:T(8,128)}', space=vmem, size = 0x1000, scoped, tag = 'scratch operand']
  %s0 = inlined_call_operand.hbm [shape: f32[2,8,128], index: 0, kind: input, shape index: {}]
  %s1 = inlined_call_operand.vmem [shape: f32[2,10,128], index: 1, kind: output, shape index: {}]
  %s2 = sld [smem:[#allocation0]]
  $region87: #{tpu_custom_call.1} parent=0
    _
  %s4 = ssub.s32 1, %s2
  %s5 = scalar_select 0, %s4, %s2
  $region1: #{tpu_custom_call.1} parent=0
    #allocation3 [shape = 'u8[16384]{0}', space=vmem, size = 0x4000, scoped, tag = 'input window, operand 0']
    #allocation4 [shape = 's32[2]{0}', space=sflag, size = 0x8, scoped, tag = 'scoped memory for tpu_custom_call.1']
    #allocation5 [shape = 'u8[16384]{0}', space=vmem, size = 0x4000, scoped, tag = 'output window, operand 0']
    %6 = vsyncpa [#allocation4], 0
    %s7 = scalar_lea.sflag [#allocation4], 1
    %8 = vsyncpa %s7, 0
    loop: start=0, step=1, limit=4
    $region2: #{tpu_custom_call.1} parent=1 // loop_pre_header
      _
    $region3: #{tpu_custom_call.1} parent=1 // loop_header
      %s10 = sphi 0, %s14
      %p11 = scmp.ge.s32.totalorder %s10, 4
      %s24 = sphi 0, %s26
      %s27 = sphi 0, %s24
      %s28 = sphi 0, %s27
      %s44 = sphi 0, %s28
      %s50 = sphi 0, %s52
      %s53 = sphi 0, %s50
      %s54 = sphi 0, %s53
      %s70 = sphi 0, %s54
    $region4: #{tpu_custom_call.1} parent=1 // loop_header_branch
      %13 = sbr.rel (%p11) target = $region8
    $region5: #{tpu_custom_call.1} parent=1 // loop_body
      %s15 = ssub.s32 %s10, 1
      %s16 = ssub.s32 %s10, 2
      %s17 = sadd.s32 %s10, 1
      %p18 = scmp.lt.s32.totalorder %s10, 0
      %s19 = scalar_select %p18, %s10, 0
      %p20 = scmp.lt.s32.totalorder %s17, 0
      %s21 = scalar_select %p20, %s17, 0
      %s22 = ssub.s32 %s19, %s21
      %p23 = scmp.eq.s32.totalorder %s22, 0
      %s25 = sadd.s32 %s24, 1
      %s26 = scalar_select %p23, %s24, %s25
      %p29 = pneg %p23
      %p30 = scmp.eq.s32.totalorder %s10, 1
      %p31 = por %p29, %p30
      %p32 = scmp.ne.s32.totalorder %s24, %s27
      %p33 = scmp.eq.s32.totalorder %s10, 0
      %p34 = por %p32, %p33
      %p35 = scmp.ne.s32.totalorder %s24, %s27
      %p36 = scmp.eq.s32.totalorder %s15, 1
      %p37 = por %p35, %p36
      %p38 = scmp.ne.s32.totalorder %s27, %s28
      %p39 = scmp.eq.s32.totalorder %s15, 0
      %p40 = por %p38, %p39
      %p41 = scmp.ne.s32.totalorder %s27, %s28
      %p42 = scmp.eq.s32.totalorder %s16, 1
      %p43 = por %p41, %p42
      %p45 = scmp.ne.s32.totalorder %s28, %s44
      %p46 = scmp.eq.s32.totalorder %s16, 0
      %p47 = por %p45, %p46
      %s48 = ssub.s32 %s10, %s17
      %p49 = scmp.eq.s32.totalorder %s48, 0
      %s51 = sadd.s32 %s50, 1
      %s52 = scalar_select %p49, %s50, %s51
      %p55 = pneg %p49
      %p56 = scmp.eq.s32.totalorder %s10, 1
      %p57 = por %p55, %p56
      %p58 = scmp.ne.s32.totalorder %s50, %s53
      %p59 = scmp.eq.s32.totalorder %s10, 0
      %p60 = por %p58, %p59
      %p61 = scmp.ne.s32.totalorder %s50, %s53
      %p62 = scmp.eq.s32.totalorder %s15, 1
      %p63 = por %p61, %p62
      %p64 = scmp.ne.s32.totalorder %s53, %s54
      %p65 = scmp.eq.s32.totalorder %s15, 0
      %p66 = por %p64, %p65
      %p67 = scmp.ne.s32.totalorder %s53, %s54
      %p68 = scmp.eq.s32.totalorder %s16, 1
      %p69 = por %p67, %p68
      %p71 = scmp.ne.s32.totalorder %s54, %s70
      %p72 = scmp.eq.s32.totalorder %s16, 0
      %p73 = por %p71, %p72
      %p74 = scmp.le.s32.totalorder 1, %s10
      %p75 = scmp.lt.s32.totalorder %s10, 3
      %p76 = pnand %p74, %p75
      %p77 = pneg %p76
      // Predicated region
      $region9: #{tpu_custom_call.1} parent=5 // pred_check
        _
      $region10: #{tpu_custom_call.1} parent=5 // pred_check_branch
        %79 = sbr.rel (%p76) target = $region12
      $region11: #{tpu_custom_call.1} parent=5 // pred_region
        %s80 = ssub.s32 %s10, 1
      $region12: #{tpu_custom_call.1} parent=5 // pred_fallthru
        _
      %p81 = scmp.lt.s32.totalorder %s10, 2
      // Predicated region
      $region13: #{tpu_custom_call.1} parent=5 // pred_check
        %p82 = pneg %p81
      $region14: #{tpu_custom_call.1} parent=5 // pred_check_branch
        %84 = sbr.rel (%p82) target = $region16
      $region15: #{tpu_custom_call.1} parent=5 // pred_region
        // Predicated region
        $region17: #{tpu_custom_call.1} parent=15 // pred_check
          %p85 = pneg %p34
        $region18: #{tpu_custom_call.1} parent=15 // pred_check_branch
          %87 = sbr.rel (%p85) target = $region20
        $region19: #{tpu_custom_call.1} parent=15 // pred_region
          %s88 = sand.u32 %s24, 1
          %s89 = scalar_lea.sflag [#allocation4], %s88
          %s90 = sand.u32 %s24, 1
          %s91 = smul.addr %s90, 16
          %s92 = scalar_lea.vmem [#allocation3], %s91
          %p93 = scmp.lt.s32.totalorder %s10, 0
          %s94 = scalar_select %p93, %s10, 0
          %96 = vsyncadd %s89, 0
          %s97 = smul.addr %s94, 8
          %s98 = scalar_lea.hbm %s0, %s97
          %s99 = sshll.u32 %s98, 4
          %s100 = int_to_ptr.hbm [resolvable:$true] %s99
          %s101 = sshll.u32 %s92, 4
          %s102 = int_to_ptr.vmem [resolvable:$true] %s101
          %107 = dma.hbm_to_vmem [thread:$0]  %s100, 256, %s102, %s89, 128, 128, 8
        $region20: #{tpu_custom_call.1} parent=15 // pred_fallthru
          _
      $region16: #{tpu_custom_call.1} parent=5 // pred_fallthru
        _
      %p108 = scmp.le.s32.totalorder 1, %s10
      %p109 = scmp.lt.s32.totalorder %s10, 3
      %p110 = pnand %p108, %p109
      %p111 = pneg %p110
      // Predicated region
      $region21: #{tpu_custom_call.1} parent=5 // pred_check
        _
      $region22: #{tpu_custom_call.1} parent=5 // pred_check_branch
        %113 = sbr.rel (%p110) target = $region24
      $region23: #{tpu_custom_call.1} parent=5 // pred_region
        %s114 = ssub.s32 %s10, 1
        %s115 = sand.u32 %s27, 1
        %s116 = scalar_lea.sflag [#allocation4], %s115
        %s117 = sand.u32 %s27, 1
        %s118 = smul.addr %s117, 16
        %s119 = scalar_lea.vmem [#allocation3], %s118
        // Predicated region
        $region25: #{tpu_custom_call.1} parent=23 // pred_check
          %p120 = pneg %p40
        $region26: #{tpu_custom_call.1} parent=23 // pred_check_branch
          %122 = sbr.rel (%p120) target = $region28
        $region27: #{tpu_custom_call.1} parent=23 // pred_region
          %124 = dma.done %s116, 256
        $region28: #{tpu_custom_call.1} parent=23 // pred_fallthru
          _
        %s125 = sand.u32 %s27, 1
        %s126 = scalar_lea.sflag [#allocation4], %s125
        %s127 = sand.u32 %s27, 1
        %s128 = smul.addr %s127, 16
        %s129 = scalar_lea.vmem [#allocation3], %s128
        %p130 = pneg %p40
        %p131 = pneg %p37
        %p132 = pneg %p66
        %p133 = pneg %p63
        %s134 = sand.u32 %s53, 1
        %s135 = sand.u32 %s53, 1
        %s136 = smul.addr %s135, 16
        %s137 = scalar_lea.vmem [#allocation5], %s136
        %p138 = scmp.lt.s32.totalorder %s15, 0
        %s139 = scalar_select %p138, %s15, 0
        %p140 = scmp.eq.s32.totalorder %s15, 0
        // Predicated region
        $region29: #{tpu_custom_call.1} parent=23 // pred_check
          %p141 = pneg %p140
        $region30: #{tpu_custom_call.1} parent=23 // pred_check_branch
          %143 = sbr.rel (%p141) target = $region32
        $region31: #{tpu_custom_call.1} parent=23 // pred_region
          %144 = vst [vmem:[#allocation2] sm:$0xff] 0.0
        $region32: #{tpu_custom_call.1} parent=23 // pred_fallthru
          _
        %p145 = scmp.lt.s32.totalorder %s15, 1
        // Predicated region
        $region33: #{tpu_custom_call.1} parent=23 // pred_check
          %p146 = pneg %p145
        $region34: #{tpu_custom_call.1} parent=23 // pred_check_branch
          %148 = sbr.rel (%p146) target = $region36
        $region35: #{tpu_custom_call.1} parent=23 // pred_region
          %v149 = vld [vmem:[%s119] sm:$0xff]
          %v150 = vld [vmem:[%s119 + $0x8] sm:$0xff]
          %151 = vst [vmem:[%s137] sm:$0xff] %v149
          %152 = vst [vmem:[%s137 + $0x8] sm:$0xff] %v150
          %v153 = vadd.f32 %v149, %v150
          %v154 = vrcp.pop 2.0
          %v155 = vmul.f32 2.0, %v154
          %v156 = vsub.f32 1.0, %v155
          %v157 = vmul.f32 %v154, %v156
          %v158 = vadd.f32 %v154, %v157
          %vm159 = vweird.f32 %v154
          %v160 = vsel %vm159, %v154, %v158
          %v161 = vmul.f32 %v153, %v160
          %v162 = vsub.f32 %v149, %v161
          %v163 = vsub.f32 %v150, %v161
          %v164 = vmul.f32 %v162, %v162
          %v165 = vmul.f32 %v163, %v163
          %v166 = vadd.f32 %v164, %v165
          %v167 = vld [vmem:[#allocation2] sm:$0xff]
          %v168 = vrsqrt.pop %v166
          %v169 = vmul.f32 %v168, %v166
          %v170 = vmul.f32 %v169, %v168
          %v171 = vmul.f32 0.5, %v170
          %v172 = vsub.f32 1.5, %v171
          %v173 = vmul.f32 %v168, %v172
          %v174 = vmul.f32 %v166, %v173
          %vm175 = vcmp.eq.f32.partialorder %v166, inf
          %v176 = vsel %vm175, %v166, %v174
          %vm177 = vcmp.eq.f32.partialorder %v166, 0.0
          %v178 = vand.u32 %v166, 2147483648
          %v179 = vsel %vm177, %v178, %v176
          %v180 = vadd.f32 %v167, %v179
          %181 = vst [vmem:[#allocation2] sm:$0xff] %v180
        $region36: #{tpu_custom_call.1} parent=23 // pred_fallthru
          _
        %p182 = scmp.ge.s32.totalorder %s15, 1
        // Predicated region
        $region37: #{tpu_custom_call.1} parent=23 // pred_check
          %p183 = pneg %p182
        $region38: #{tpu_custom_call.1} parent=23 // pred_check_branch
          %185 = sbr.rel (%p183) target = $region40
        $region39: #{tpu_custom_call.1} parent=23 // pred_region
          %v186 = vld [vmem:[#allocation2] sm:$0xff]
          %187 = vadd.xlane.f32.xlu0 %v186
          %v188 = vpop.xlane.xlu0 %187
          %v189 = vrot.slane %v188, 4
          %v190 = vadd.f32 %v188, %v189
          %v191 = vrot.slane %v190, 2
          %v192 = vadd.f32 %v190, %v191
          %v193 = vrot.slane %v192, 1
          %v194 = vadd.f32 %v192, %v193
          %s195 = vtos %v194
          %s196 = smul.f32 %s195, 0.0009765625
          %v197 = vstv %s196
          %198 = vst [vmem:[%s137] sm:$0xff] %v197
          %199 = vst [vmem:[%s137 + $0x8] sm:$0xff] %v197
        $region40: #{tpu_custom_call.1} parent=23 // pred_fallthru
          _
        %s200 = sand.u32 %s53, 1
        %s201 = sand.u32 %s53, 1
        %s202 = smul.addr %s201, 16
        %s203 = scalar_lea.vmem [#allocation5], %s202
        // Predicated region
        $region41: #{tpu_custom_call.1} parent=23 // pred_check
          %p204 = pneg %p63
        $region42: #{tpu_custom_call.1} parent=23 // pred_check_branch
          %206 = sbr.rel (%p204) target = $region44
        $region43: #{tpu_custom_call.1} parent=23 // pred_region
          %s207 = smul.addr %s15, 8
          %s208 = scalar_lea.vmem %s1, %s207
          // Predicated region
          $region45: #{tpu_custom_call.1} parent=43 // pred_check
            _
          $region46: #{tpu_custom_call.1} parent=43 // pred_check_branch
            %210 = sbr.rel (0) target = $region48
          $region47: #{tpu_custom_call.1} parent=43 // pred_region
            // Predicated region
            $region49: #{tpu_custom_call.1} parent=47 // pred_check
              _
            $region50: #{tpu_custom_call.1} parent=47 // pred_check_branch
              %212 = sbr.rel (0) target = $region52
            $region51: #{tpu_custom_call.1} parent=47 // pred_region
              // Predicated region
              $region64: #{tpu_custom_call.1} parent=51 // pred_check
                _
              $region65: #{tpu_custom_call.1} parent=51 // pred_check_branch
                %230 = sbr.rel (0) target = $region67
              $region66: #{tpu_custom_call.1} parent=51 // pred_region
                loop: start=0, step=1, limit=1
                $region68: #{tpu_custom_call.1} parent=66 // loop_pre_header
                  _
                $region69: #{tpu_custom_call.1} parent=66 // loop_header
                  %s232 = sphi 0, %s236
                  %p233 = scmp.ge.s32.totalorder %s232, 1
                  %s237 = sphi %s203, %s203
                  %s238 = sphi %s208, %s208
                $region70: #{tpu_custom_call.1} parent=66 // loop_header_branch
                  %235 = sbr.rel (%p233) target = $region74
                $region71: #{tpu_custom_call.1} parent=66 // loop_body
                  %v239 = vld [vmem:[%s237] sm:$0xff]
                  %240 = vst [vmem:[%s238] sm:$0xff] %v239
                  %v241 = vld [vmem:[%s237 + $0x8] sm:$0xff]
                  %242 = vst [vmem:[%s238 + $0x10] sm:$0xff] %v241
                $region72: #{tpu_custom_call.1} parent=66 // loop_footer
                  %s236 = sadd.s32 1, %s232
                $region73: #{tpu_custom_call.1} parent=66 // loop_footer_branch
                  %231 = sbr.rel target = $region69
                $region74: #{tpu_custom_call.1} parent=66 // loop_exit
                  _
              $region67: #{tpu_custom_call.1} parent=51 // pred_fallthru
                _
              // Predicated region
              $region75: #{tpu_custom_call.1} parent=51 // pred_check
                _
              $region76: #{tpu_custom_call.1} parent=51 // pred_check_branch
                %244 = sbr.rel target = $region78
              $region77: #{tpu_custom_call.1} parent=51 // pred_region
                _
              $region78: #{tpu_custom_call.1} parent=51 // pred_fallthru
                _
            $region52: #{tpu_custom_call.1} parent=47 // pred_fallthru
              _
            // Predicated region
            $region53: #{tpu_custom_call.1} parent=47 // pred_check
              _
            $region54: #{tpu_custom_call.1} parent=47 // pred_check_branch
              %214 = sbr.rel target = $region56
            $region55: #{tpu_custom_call.1} parent=47 // pred_region
              %s216 = ssub.s32 256, 1
              loop: start=0, step=1, limit=1
              $region57: #{tpu_custom_call.1} parent=55 // loop_pre_header
                _
              $region58: #{tpu_custom_call.1} parent=55 // loop_header
                %s218 = sphi 0, %s222
                %p219 = scmp.ge.s32.totalorder %s218, 1
                %s223 = sphi %s203, %s203
                %s224 = sphi %s208, %s208
              $region59: #{tpu_custom_call.1} parent=55 // loop_header_branch
                %221 = sbr.rel (%p219) target = $region63
              $region60: #{tpu_custom_call.1} parent=55 // loop_body
                %v225 = vld [vmem:[%s223] sm:%s216]
                %226 = vst [vmem:[%s224] sm:%s216] %v225
                %v227 = vld [vmem:[%s223 + $0x8] sm:%s216]
                %228 = vst [vmem:[%s224 + $0x10] sm:%s216] %v227
              $region61: #{tpu_custom_call.1} parent=55 // loop_footer
                %s222 = sadd.s32 1, %s218
              $region62: #{tpu_custom_call.1} parent=55 // loop_footer_branch
                %217 = sbr.rel target = $region58
              $region63: #{tpu_custom_call.1} parent=55 // loop_exit
                _
            $region56: #{tpu_custom_call.1} parent=47 // pred_fallthru
              _
          $region48: #{tpu_custom_call.1} parent=43 // pred_fallthru
            _
          %245 = vnop
        $region44: #{tpu_custom_call.1} parent=23 // pred_fallthru
          _
      $region24: #{tpu_custom_call.1} parent=5 // pred_fallthru
        _
      %p246 = scmp.le.s32.totalorder 2, %s10
      // Predicated region
      $region79: #{tpu_custom_call.1} parent=5 // pred_check
        %p247 = pneg %p246
      $region80: #{tpu_custom_call.1} parent=5 // pred_check_branch
        %249 = sbr.rel (%p247) target = $region82
      $region81: #{tpu_custom_call.1} parent=5 // pred_region
        %s250 = ssub.s32 %s10, 2
        // Predicated region
        $region83: #{tpu_custom_call.1} parent=81 // pred_check
          %p251 = pneg %p69
        $region84: #{tpu_custom_call.1} parent=81 // pred_check_branch
          %253 = sbr.rel (%p251) target = $region86
        $region85: #{tpu_custom_call.1} parent=81 // pred_region
          %s254 = sand.u32 %s54, 1
          %s255 = sand.u32 %s54, 1
          %s256 = smul.addr %s255, 16
          %s257 = scalar_lea.vmem [#allocation5], %s256
        $region86: #{tpu_custom_call.1} parent=81 // pred_fallthru
          _
      $region82: #{tpu_custom_call.1} parent=5 // pred_fallthru
        _
    $region6: #{tpu_custom_call.1} parent=1 // loop_footer
      %s14 = sadd.s32 1, %s10
    $region7: #{tpu_custom_call.1} parent=1 // loop_footer_branch
      %9 = sbr.rel target = $region3
    $region8: #{tpu_custom_call.1} parent=1 // loop_exit
      _
    %258 = vsyncpa [#allocation4], 1
    %s259 = scalar_lea.sflag [#allocation4], 1
    %260 = vsyncpa %s259, 1

</llo_original>
